<compile_context>
chip_gen: v7x
topology: tpu7x:2x2x1
jax: 0.10.0
libtpu: 0.0.40
codegen_flags: <defaults>
</compile_context>

<pallas_src>
import jax
import jax.numpy as jnp
from jax.experimental import pallas as pl
from jax.experimental.pallas import tpu as pltpu


def _copy_kernel(x_ref, o_ref):
    # Identity copy of the current tile (the only "compute" a squeeze implies).
    o_ref[...] = x_ref[...]


def _min_sublane(dtype):
    """Minimum second-minor tile granularity for a packed dtype."""
    itemsize = jnp.dtype(dtype).itemsize
    if itemsize >= 4:
        return 8
    if itemsize == 2:
        return 16
    return 32


def _choose_lane_view(n_elems, min_rows):
    """Pick (rows, lanes) with rows * lanes == n_elems and lanes % 128 == 0.

    Prefers the widest lane dim that still leaves >= min_rows rows (so the
    row grid can be tiled / split across TensorCores).  Returns None if no
    multiple-of-128 lane width divides n_elems.
    """
    fallback = None
    for lanes in (4096, 2048, 1024, 512, 256, 128):
        if n_elems % lanes == 0:
            rows = n_elems // lanes
            if rows >= min_rows:
                return rows, lanes
            if fallback is None:
                fallback = (rows, lanes)
    return fallback


_TILE_BYTES = 8 * 1024 * 1024    # ~8 MiB/tile -> ~32 MiB live (in+out, double-buffered)
_VMEM_LIMIT = 48 * 1024 * 1024   # fits v7x's 64 MiB physical VMEM, raises v5e/v6e defaults


def _pallas_copy_2d(x2d):
    """Identity copy of a lane-dense 2D array, tiled along rows."""
    M, N = x2d.shape
    itemsize = jnp.dtype(x2d.dtype).itemsize
    sub = _min_sublane(x2d.dtype)

    # Byte-budgeted row tile, rounded down to the dtype's sublane granularity.
    tm = max((_TILE_BYTES // (N * itemsize)) // sub * sub, sub)
    if tm >= M:
        if M >= 2 * sub:
            # Keep at least 2 grid steps so v7x's two TensorCores both get work
            # and the DMA pipeline actually overlaps.
            tm = pl.cdiv(pl.cdiv(M, 2), sub) * sub
        else:
            tm = M  # tiny input: a single full-extent block is legal and cheapest
    grid = (pl.cdiv(M, tm),)

    return pl.pallas_call(
        _copy_kernel,
        out_shape=jax.ShapeDtypeStruct((M, N), x2d.dtype),
        grid_spec=pltpu.PrefetchScalarGridSpec(
            num_scalar_prefetch=0,
            grid=grid,
            in_specs=[pl.BlockSpec((tm, N), lambda i: (i, 0))],
            out_specs=pl.BlockSpec((tm, N), lambda i: (i, 0)),
        ),
        # Identity copy: alias output onto the input buffer (no 2nd HBM alloc).
        input_output_aliases={0: 0},
        cost_estimate=pl.CostEstimate(
            flops=0,
            transcendentals=0,
            bytes_accessed=2 * M * N * itemsize,
        ),
        compiler_params=pltpu.CompilerParams(
            dimension_semantics=("parallel",),
            vmem_limit_bytes=_VMEM_LIMIT,
        ),
    )(x2d)


class Squeeze:
    """JAX/Pallas port of the PyTorch Squeeze module."""

    def __init__(self, *dim):
        if all(v >= 0 for v in dim):
            self.dim = sorted(dim, reverse=True)
        elif all(v < 0 for v in dim):
            self.dim = sorted(dim)
        # (mixed-sign dims leave self.dim undefined, matching the torch module)

    def __call__(self, x):
        # Compute the output shape exactly like sequential torch.squeeze calls.
        shape = list(x.shape)
        for d in self.dim:
            nd = len(shape)
            dd = d if d >= 0 else d + nd
            if 0 <= dd < nd and shape[dd] == 1:
                shape.pop(dd)
        out_shape = tuple(shape)

        n_elems = x.size
        if n_elems == 0:
            # Zero-element tensor: metadata-only change, nothing to copy.
            return x.reshape(out_shape)

        sub = _min_sublane(x.dtype)
        view = _choose_lane_view(n_elems, min_rows=2 * sub)
        if view is None:
            # No lane-dense (multiple-of-128) factorization of the flat size:
            # squeeze is metadata-only, so a free reshape is the fastest path.
            return x.reshape(out_shape)

        rows, lanes = view
        y2d = _pallas_copy_2d(x.reshape(rows, lanes))
        return y2d.reshape(out_shape)


if __name__ == "__main__":
    key = jax.random.PRNGKey(0)
    # Small shape consistent with squeezing dims 1 and 3 (the singleton axes).
    x = jax.random.normal(key, (2, 1, 64, 1, 128), dtype=jnp.float32)

    mod = Squeeze(1, 3)
    y = mod(x)
    y = jax.block_until_ready(y)

    # Reference check: squeeze is shape-only, values unchanged.
    ref = jnp.squeeze(jnp.squeeze(x, axis=3), axis=1)
    assert y.shape == (2, 64, 128), y.shape
    assert jnp.allclose(y, ref), "value mismatch"

    print("KERNEL_OK")
</pallas_src>

<mosaic_0001>
module attributes {stable_mosaic.version = 11 : i64} {
  func.func @_copy_kernel(%arg0: i32, %arg1: memref<8x1024xf32, #tpu.memory_space<vmem>>, %arg2: memref<8x1024xf32, #tpu.memory_space<vmem>>) attributes {dimension_semantics = [#tpu.dimension_semantics<parallel>], iteration_bounds = array<i64: 2>, scalar_prefetch = 0 : i64, scratch_operands = 0 : i64, tpu.core_type = #tpu.core_type<tc>, window_params = [{transform_indices = @transform_0, window_bounds = array<i64: 8, 1024>}, {transform_indices = @transform_1, window_bounds = array<i64: 8, 1024>}]} {
    %c0 = arith.constant 0 : index
    %c0_0 = arith.constant 0 : index
    %0 = vector.load %arg1[%c0, %c0_0] : memref<8x1024xf32, #tpu.memory_space<vmem>>, vector<8x1024xf32>
    %c0_1 = arith.constant 0 : index
    %c0_2 = arith.constant 0 : index
    %1 = vector.load %arg2[%c0_1, %c0_2] : memref<8x1024xf32, #tpu.memory_space<vmem>>, vector<8x1024xf32>
    tpu.vector_store %arg2[%c0_1, %c0_2], %0 {strides = array<i32>} : memref<8x1024xf32, #tpu.memory_space<vmem>>, vector<8x1024xf32>,
    return
  }
  func.func @transform_0(%arg0: i32) -> (i32, i32) {
    %c0_i32 = arith.constant 0 : i32
    %c0_i32_0 = arith.constant 0 : i32
    return %arg0, %c0_i32 : i32, i32
  }
  func.func @transform_1(%arg0: i32) -> (i32, i32) {
    %c0_i32 = arith.constant 0 : i32
    %c0_i32_0 = arith.constant 0 : i32
    return %arg0, %c0_i32 : i32, i32
  }
}

</mosaic_0001>

<llo_original>
// kernel: tpu_custom_call.1
$region0: #{tpu_custom_call.1}
  #allocation0 [shape = 'u32[]', space=smem, size = 0x4, offset = 0x4, fixed_abs, tag = 'smem constant byte address 0x4 - core index']
  #allocation1 [shape = 'u32[144,128]{1,0:T(1,128)}', space=vmem, size = 0x12000, scoped, tag = 'internal scratch']
  %s0 = inlined_call_operand.hbm [shape: f32[16,1024], index: 0, kind: input, shape index: {}, may-alias: {0,1}]
  %s1 = inlined_call_operand.hbm [shape: f32[16,1024], index: 1, kind: output, shape index: {}, may-alias: {0,1}]
  %s2 = sld [smem:[#allocation0]]
  $region41: #{tpu_custom_call.1} parent=0
    _
  %s4 = ssub.s32 1, %s2
  %s5 = scalar_select 0, %s4, %s2
  $region1: #{tpu_custom_call.1} parent=0
    #allocation2 [shape = 'u8[65536]{0}', space=vmem, size = 0x10000, scoped, tag = 'input window, operand 0']
    #allocation3 [shape = 's32[2]{0}', space=sflag, size = 0x8, scoped, tag = 'scoped memory for tpu_custom_call.1']
    #allocation4 [shape = 's32[2]{0}', space=sflag, size = 0x8, scoped, tag = 'scoped memory for tpu_custom_call.1']
    #allocation5 [shape = 'u8[65536]{0}', space=vmem, size = 0x10000, scoped, tag = 'output window, operand 0']
    %6 = vsyncpa [#allocation3], 0
    %s7 = scalar_lea.sflag [#allocation3], 1
    %8 = vsyncpa %s7, 0
    %9 = vsyncpa [#allocation4], 0
    %s10 = scalar_lea.sflag [#allocation4], 1
    %11 = vsyncpa %s10, 0
    loop: start=0, step=1, limit=4
    $region2: #{tpu_custom_call.1} parent=1 // loop_pre_header
      _
    $region3: #{tpu_custom_call.1} parent=1 // loop_header
      %s13 = sphi 0, %s17
      %p14 = scmp.ge.s32.totalorder %s13, 4
      %s23 = sphi 0, %s25
      %s26 = sphi 0, %s23
      %s27 = sphi 0, %s26
      %s43 = sphi 0, %s27
      %s49 = sphi 0, %s51
      %s52 = sphi 0, %s49
      %s53 = sphi 0, %s52
      %s69 = sphi 0, %s53
    $region4: #{tpu_custom_call.1} parent=1 // loop_header_branch
      %16 = sbr.rel (%p14) target = $region8
    $region5: #{tpu_custom_call.1} parent=1 // loop_body
      %s18 = ssub.s32 %s13, 1
      %s19 = ssub.s32 %s13, 2
      %s20 = sadd.s32 %s13, 1
      %s21 = ssub.s32 %s13, %s20
      %p22 = scmp.eq.s32.totalorder %s21, 0
      %s24 = sadd.s32 %s23, 1
      %s25 = scalar_select %p22, %s23, %s24
      %p28 = pneg %p22
      %p29 = scmp.eq.s32.totalorder %s13, 1
      %p30 = por %p28, %p29
      %p31 = scmp.ne.s32.totalorder %s23, %s26
      %p32 = scmp.eq.s32.totalorder %s13, 0
      %p33 = por %p31, %p32
      %p34 = scmp.ne.s32.totalorder %s23, %s26
      %p35 = scmp.eq.s32.totalorder %s18, 1
      %p36 = por %p34, %p35
      %p37 = scmp.ne.s32.totalorder %s26, %s27
      %p38 = scmp.eq.s32.totalorder %s18, 0
      %p39 = por %p37, %p38
      %p40 = scmp.ne.s32.totalorder %s26, %s27
      %p41 = scmp.eq.s32.totalorder %s19, 1
      %p42 = por %p40, %p41
      %p44 = scmp.ne.s32.totalorder %s27, %s43
      %p45 = scmp.eq.s32.totalorder %s19, 0
      %p46 = por %p44, %p45
      %s47 = ssub.s32 %s13, %s20
      %p48 = scmp.eq.s32.totalorder %s47, 0
      %s50 = sadd.s32 %s49, 1
      %s51 = scalar_select %p48, %s49, %s50
      %p54 = pneg %p48
      %p55 = scmp.eq.s32.totalorder %s13, 1
      %p56 = por %p54, %p55
      %p57 = scmp.ne.s32.totalorder %s49, %s52
      %p58 = scmp.eq.s32.totalorder %s13, 0
      %p59 = por %p57, %p58
      %p60 = scmp.ne.s32.totalorder %s49, %s52
      %p61 = scmp.eq.s32.totalorder %s18, 1
      %p62 = por %p60, %p61
      %p63 = scmp.ne.s32.totalorder %s52, %s53
      %p64 = scmp.eq.s32.totalorder %s18, 0
      %p65 = por %p63, %p64
      %p66 = scmp.ne.s32.totalorder %s52, %s53
      %p67 = scmp.eq.s32.totalorder %s19, 1
      %p68 = por %p66, %p67
      %p70 = scmp.ne.s32.totalorder %s53, %s69
      %p71 = scmp.eq.s32.totalorder %s19, 0
      %p72 = por %p70, %p71
      %p73 = scmp.le.s32.totalorder 1, %s13
      %p74 = scmp.lt.s32.totalorder %s13, 3
      %p75 = pnand %p73, %p74
      %p76 = pneg %p75
      // Predicated region
      $region9: #{tpu_custom_call.1} parent=5 // pred_check
        _
      $region10: #{tpu_custom_call.1} parent=5 // pred_check_branch
        %78 = sbr.rel (%p75) target = $region12
      $region11: #{tpu_custom_call.1} parent=5 // pred_region
        %s79 = ssub.s32 %s13, 1
      $region12: #{tpu_custom_call.1} parent=5 // pred_fallthru
        _
      %p80 = scmp.lt.s32.totalorder %s13, 2
      // Predicated region
      $region13: #{tpu_custom_call.1} parent=5 // pred_check
        %p81 = pneg %p80
      $region14: #{tpu_custom_call.1} parent=5 // pred_check_branch
        %83 = sbr.rel (%p81) target = $region16
      $region15: #{tpu_custom_call.1} parent=5 // pred_region
        // Predicated region
        $region17: #{tpu_custom_call.1} parent=15 // pred_check
          %p84 = pneg %p33
        $region18: #{tpu_custom_call.1} parent=15 // pred_check_branch
          %86 = sbr.rel (%p84) target = $region20
        $region19: #{tpu_custom_call.1} parent=15 // pred_region
          %s87 = sand.u32 %s23, 1
          %s88 = scalar_lea.sflag [#allocation3], %s87
          %s89 = sand.u32 %s23, 1
          %s90 = smul.addr %s89, 64
          %s91 = scalar_lea.vmem [#allocation2], %s90
          %s93 = ssub.s32 1024, 1024
          %94 = vsyncadd %s88, %s93
          %s95 = smul.addr %s13, 8
          %s96 = smul.addr %s95, 128
          %s97 = scalar_lea.hbm %s0, %s96
          %s99 = sshll.u32 %s91, 4
          %s100 = int_to_ptr.vmem [resolvable:$true] %s99
          %102 = dma.hbm_to_vmem [thread:$0]  %s97, 1024, %s100, %s88
        $region20: #{tpu_custom_call.1} parent=15 // pred_fallthru
          _
      $region16: #{tpu_custom_call.1} parent=5 // pred_fallthru
        _
      %p103 = scmp.le.s32.totalorder 1, %s13
      %p104 = scmp.lt.s32.totalorder %s13, 3
      %p105 = pnand %p103, %p104
      %p106 = pneg %p105
      // Predicated region
      $region21: #{tpu_custom_call.1} parent=5 // pred_check
        _
      $region22: #{tpu_custom_call.1} parent=5 // pred_check_branch
        %108 = sbr.rel (%p105) target = $region24
      $region23: #{tpu_custom_call.1} parent=5 // pred_region
        %s109 = ssub.s32 %s13, 1
        %s110 = sand.u32 %s26, 1
        %s111 = scalar_lea.sflag [#allocation3], %s110
        %s112 = sand.u32 %s26, 1
        %s113 = smul.addr %s112, 64
        %s114 = scalar_lea.vmem [#allocation2], %s113
        // Predicated region
        $region25: #{tpu_custom_call.1} parent=23 // pred_check
          %p115 = pneg %p39
        $region26: #{tpu_custom_call.1} parent=23 // pred_check_branch
          %117 = sbr.rel (%p115) target = $region28
        $region27: #{tpu_custom_call.1} parent=23 // pred_region
          %118 = dma.done %s111, 1024
        $region28: #{tpu_custom_call.1} parent=23 // pred_fallthru
          _
        %s119 = sand.u32 %s26, 1
        %s120 = scalar_lea.sflag [#allocation3], %s119
        %s121 = sand.u32 %s26, 1
        %s122 = smul.addr %s121, 64
        %s123 = scalar_lea.vmem [#allocation2], %s122
        %p124 = pneg %p39
        %p125 = pneg %p36
        %p126 = pneg %p65
        %p127 = pneg %p62
        %s128 = sand.u32 %s52, 1
        %s129 = scalar_lea.sflag [#allocation4], %s128
        %s130 = sand.u32 %s52, 1
        %s131 = smul.addr %s130, 64
        %s132 = scalar_lea.vmem [#allocation5], %s131
        %v133 = vld [vmem:[%s114] sm:$0xff]
        %v134 = vld [vmem:[%s114 + $0x8] sm:$0xff]
        %v135 = vld [vmem:[%s114 + $0x10] sm:$0xff]
        %v136 = vld [vmem:[%s114 + $0x18] sm:$0xff]
        %v137 = vld [vmem:[%s114 + $0x20] sm:$0xff]
        %v138 = vld [vmem:[%s114 + $0x28] sm:$0xff]
        %v139 = vld [vmem:[%s114 + $0x30] sm:$0xff]
        %v140 = vld [vmem:[%s114 + $0x38] sm:$0xff]
        %141 = vst [vmem:[%s132] sm:$0xff] %v133
        %142 = vst [vmem:[%s132 + $0x8] sm:$0xff] %v134
        %143 = vst [vmem:[%s132 + $0x10] sm:$0xff] %v135
        %144 = vst [vmem:[%s132 + $0x18] sm:$0xff] %v136
        %145 = vst [vmem:[%s132 + $0x20] sm:$0xff] %v137
        %146 = vst [vmem:[%s132 + $0x28] sm:$0xff] %v138
        %147 = vst [vmem:[%s132 + $0x30] sm:$0xff] %v139
        %148 = vst [vmem:[%s132 + $0x38] sm:$0xff] %v140
        %s149 = sand.u32 %s52, 1
        %s150 = scalar_lea.sflag [#allocation4], %s149
        %s151 = sand.u32 %s52, 1
        %s152 = smul.addr %s151, 64
        %s153 = scalar_lea.vmem [#allocation5], %s152
        // Predicated region
        $region29: #{tpu_custom_call.1} parent=23 // pred_check
          %p154 = pneg %p62
        $region30: #{tpu_custom_call.1} parent=23 // pred_check_branch
          %156 = sbr.rel (%p154) target = $region32
        $region31: #{tpu_custom_call.1} parent=23 // pred_region
          %s158 = ssub.s32 1024, 1024
          %159 = vsyncadd %s150, %s158
          %s160 = smul.addr %s18, 8
          %s161 = smul.addr %s160, 128
          %s162 = scalar_lea.hbm %s1, %s161
          %s164 = sshll.u32 %s153, 4
          %s165 = int_to_ptr.vmem [resolvable:$true] %s164
          %167 = dma.vmem_to_hbm [thread:$0]  %s165, 1024, %s162, %s150
        $region32: #{tpu_custom_call.1} parent=23 // pred_fallthru
          _
      $region24: #{tpu_custom_call.1} parent=5 // pred_fallthru
        _
      %p168 = scmp.le.s32.totalorder 2, %s13
      // Predicated region
      $region33: #{tpu_custom_call.1} parent=5 // pred_check
        %p169 = pneg %p168
      $region34: #{tpu_custom_call.1} parent=5 // pred_check_branch
        %171 = sbr.rel (%p169) target = $region36
      $region35: #{tpu_custom_call.1} parent=5 // pred_region
        %s172 = ssub.s32 %s13, 2
        // Predicated region
        $region37: #{tpu_custom_call.1} parent=35 // pred_check
          %p173 = pneg %p68
        $region38: #{tpu_custom_call.1} parent=35 // pred_check_branch
          %175 = sbr.rel (%p173) target = $region40
        $region39: #{tpu_custom_call.1} parent=35 // pred_region
          %s176 = sand.u32 %s53, 1
          %s177 = scalar_lea.sflag [#allocation4], %s176
          %s178 = sand.u32 %s53, 1
          %s179 = smul.addr %s178, 64
          %s180 = scalar_lea.vmem [#allocation5], %s179
          %181 = dma.done %s177, 1024
        $region40: #{tpu_custom_call.1} parent=35 // pred_fallthru
          _
      $region36: #{tpu_custom_call.1} parent=5 // pred_fallthru
        _
    $region6: #{tpu_custom_call.1} parent=1 // loop_footer
      %s17 = sadd.s32 1, %s13
    $region7: #{tpu_custom_call.1} parent=1 // loop_footer_branch
      %12 = sbr.rel target = $region3
    $region8: #{tpu_custom_call.1} parent=1 // loop_exit
      _
    %182 = vsyncpa [#allocation3], 1
    %s183 = scalar_lea.sflag [#allocation3], 1
    %184 = vsyncpa %s183, 1
    %185 = vsyncpa [#allocation4], 1
    %s186 = scalar_lea.sflag [#allocation4], 1
    %187 = vsyncpa %s186, 1

</llo_original>
